<compile_context>
chip_gen: v6e
topology: v6e:2x2x1
jax: 0.10.0
libtpu: 0.0.40
codegen_flags: <defaults>
</compile_context>

<pallas_src>
import numpy as np
import jax
import jax.numpy as jnp
from jax.experimental import pallas as pl
from jax.experimental.pallas import tpu as pltpu


def _diag_block_kernel(vec_ref, out_ref):
    # vec_ref: (bt, 1, n) energies; out_ref: (bt, n, n) -> bt full diagonal matrices.
    bt, n, _ = out_ref.shape
    row = jax.lax.broadcasted_iota(jnp.int32, (n, n), 0)
    col = jax.lax.broadcasted_iota(jnp.int32, (n, n), 1)
    on_diag = (row == col)[None]                               # (1, n, n)
    v = jnp.broadcast_to(vec_ref[...], (bt, n, n))             # v[b, r, c] = vec[b, c]
    out_ref[...] = jnp.where(on_diag, v, jnp.zeros_like(v))


def _diag_stripe_kernel(vec_ref, out_ref):
    # vec_ref: (1, 1, n) -- resident across the row-stripe axis (index_map ignores i).
    # out_ref: (1, tn, n) -- one contiguous row stripe of the output matrix.
    i = pl.program_id(1)
    _, tn, n = out_ref.shape
    row = i * tn + jax.lax.broadcasted_iota(jnp.int32, (tn, n), 0)
    col = jax.lax.broadcasted_iota(jnp.int32, (tn, n), 1)
    v = jnp.broadcast_to(vec_ref[0], (tn, n))
    out_ref[0] = jnp.where(row == col, v, jnp.zeros_like(v))


def diag_pallas(h0_vec):
    """h0_vec: (B, N) f32 -> (B, N, N) f32 batch of diagonal matrices (no padding)."""
    b, n = h0_vec.shape
    dtype = h0_vec.dtype
    vec3 = h0_vec.reshape(b, 1, n)
    out_bytes = b * n * n * 4

    if 2 * n * n * 4 <= 8 * 1024 * 1024:
        # Small/medium N: whole (N, N) matrix is one block; batch bt molecules per step.
        bt_cap = max(1, (8 * 1024 * 1024) // (2 * 4 * n * n))
        if b >= 2:
            # keep >=2 grid steps so both v7x TensorCores get work (free on v5e/v6e)
            bt_cap = min(bt_cap, max(1, b // 2))
        bt = 1
        for d in range(min(b, bt_cap), 0, -1):
            if b % d == 0:
                bt = d
                break
        grid = (b // bt,)
        in_specs = [pl.BlockSpec((bt, 1, n), lambda gi: (gi, 0, 0))]
        out_specs = pl.BlockSpec((bt, n, n), lambda gi: (gi, 0, 0))
        kernel = _diag_block_kernel
        dims = ("parallel",)
    else:
        # Large N: row stripes; one big contiguous (tn, N) writeback per step,
        # energy vector stays resident across the stripe loop.
        tn = 8
        for cand in (1024, 512, 256, 128, 64, 32, 16, 8):
            if 2 * cand * n * 4 <= 16 * 1024 * 1024:
                tn = cand
                break
        grid = (b, pl.cdiv(n, tn))
        in_specs = [pl.BlockSpec((1, 1, n), lambda bi, i: (bi, 0, 0))]
        out_specs = pl.BlockSpec((1, tn, n), lambda bi, i: (bi, i, 0))
        kernel = _diag_stripe_kernel
        dims = ("parallel", "parallel")

    return pl.pallas_call(
        kernel,
        out_shape=jax.ShapeDtypeStruct((b, n, n), dtype),
        grid_spec=pltpu.PrefetchScalarGridSpec(
            num_scalar_prefetch=0,
            grid=grid,
            in_specs=in_specs,
            out_specs=out_specs,
        ),
        compiler_params=pltpu.CompilerParams(
            dimension_semantics=dims,
            vmem_limit_bytes=32 * 1024 * 1024,
        ),
        cost_estimate=pl.CostEstimate(
            flops=0,
            transcendentals=0,
            bytes_accessed=out_bytes + b * n * 4,
        ),
    )(vec3)


class SingleAtomHamiltonian:
    """JAX/Pallas port of schnorb SingleAtomHamiltonian (non-trainable buffer)."""

    def __init__(self, orbital_energies):
        self.orbital_energies = jnp.asarray(orbital_energies, jnp.float32)

    def __call__(self, numbers, basis):
        numbers_np = np.asarray(numbers)
        basis_np = np.asarray(basis)
        oe_np = np.asarray(self.orbital_energies)
        B, A = numbers_np.shape

        # orb_mask[b, a, o] = basis[numbers[b, a], o, 2] > 0   (torch.gather on tmp1)
        orb_mask = basis_np[numbers_np, :, 2] > 0              # (B, A, N_ORB)
        counts = orb_mask.reshape(B, -1).sum(axis=1)
        assert np.all(counts == counts[0]), \
            "masked_select(...).reshape(B,1,-1) requires equal active-orbital count per batch"
        n_total = int(counts[0])

        # h0 = orbital_energies[numbers]; masked_select -> (B, n_total)
        # TODO(synk): torch.masked_select has a data-dependent output shape; the
        # compaction is done eagerly on host (forces a device->host sync) and only
        # the dense diag construction runs in the Pallas kernel.
        h0_full = oe_np[numbers_np]                            # (B, A, N_ORB)
        h0_vec = h0_full.reshape(B, -1)[orb_mask.reshape(B, -1)].reshape(B, n_total)

        # Hot path on TPU: h0[b] = diag(h0_vec[b])  (expand * eye in the reference)
        return diag_pallas(jnp.asarray(h0_vec, jnp.float32))


if __name__ == "__main__":
    key = jax.random.PRNGKey(0)

    Z_MAX, N_ORB = 10, 5
    B, A = 2, 3

    # Deterministic "parameters": per-element per-orbital energies.
    orbital_energies = jax.random.normal(key, (Z_MAX, N_ORB), dtype=jnp.float32)

    # Synthetic basis definition: element z has min(1 + z//2, N_ORB) active orbitals.
    n_active = np.minimum(1 + np.arange(Z_MAX) // 2, N_ORB)
    basis_np = np.zeros((Z_MAX, N_ORB, 3), np.float32)
    for z in range(Z_MAX):
        basis_np[z, : n_active[z], 2] = 1.0
    basis = jnp.asarray(basis_np)

    # Batch of two identical water-like molecules (H, O, H).
    numbers = jnp.asarray([[1, 8, 1], [1, 8, 1]], dtype=jnp.int32)

    model = SingleAtomHamiltonian(orbital_energies)
    h0 = model(numbers, basis)
    h0 = jax.block_until_ready(h0)

    # Pure-numpy reference of the PyTorch forward for verification.
    oe_np = np.asarray(orbital_energies)
    num_np = np.asarray(numbers)
    mask = basis_np[num_np, :, 2] > 0                          # (B, A, N_ORB)
    n_total = int(mask.reshape(B, -1).sum(axis=1)[0])
    vec = oe_np[num_np].reshape(B, -1)[mask.reshape(B, -1)].reshape(B, n_total)
    ref = vec[:, None, :] * np.eye(n_total, dtype=np.float32)[None]

    assert h0.shape == (B, n_total, n_total), h0.shape
    assert h0.dtype == jnp.float32
    assert np.allclose(np.asarray(h0), ref, atol=1e-6), "mismatch vs reference"

    print("KERNEL_OK")
</pallas_src>

<mosaic_0001>
module attributes {stable_mosaic.version = 11 : i64} {
  func.func @_diag_block_kernel(%arg0: i32, %arg1: memref<1x1x7xf32, #tpu.memory_space<vmem>>, %arg2: memref<1x7x7xf32, #tpu.memory_space<vmem>>) attributes {dimension_semantics = [#tpu.dimension_semantics<parallel>], iteration_bounds = array<i64: 2>, scalar_prefetch = 0 : i64, scratch_operands = 0 : i64, tpu.core_type = #tpu.core_type<tc>, window_params = [{transform_indices = @transform_0, window_bounds = array<i64: 1, 1, 7>}, {transform_indices = @transform_1, window_bounds = array<i64: 1, 7, 7>}]} {
    %0 = tpu.iota {dimensions = array<i32: 0>} : vector<7x7xi32>
    %1 = tpu.iota {dimensions = array<i32: 1>} : vector<7x7xi32>
    %2 = arith.cmpi eq, %0, %1 : vector<7x7xi32>
    %3 = vector.shape_cast %2 : vector<7x7xi1> to vector<1x7x7xi1>
    %c0 = arith.constant 0 : index
    %c0_0 = arith.constant 0 : index
    %c0_1 = arith.constant 0 : index
    %4 = vector.load %arg1[%c0, %c0_0, %c0_1] : memref<1x1x7xf32, #tpu.memory_space<vmem>>, vector<1x1x7xf32>
    %5 = vector.shape_cast %4 : vector<1x1x7xf32> to vector<1x1x7xf32>
    %6 = vector.broadcast %5 : vector<1x1x7xf32> to vector<1x7x7xf32>
    %cst = arith.constant 0.000000e+00 : f32
    %7 = vector.broadcast %cst : f32 to vector<1x7x7xf32>
    %8 = arith.select %3, %6, %7 : vector<1x7x7xi1>, vector<1x7x7xf32>
    %c0_2 = arith.constant 0 : index
    %c0_3 = arith.constant 0 : index
    %c0_4 = arith.constant 0 : index
    %9 = vector.load %arg2[%c0_2, %c0_3, %c0_4] : memref<1x7x7xf32, #tpu.memory_space<vmem>>, vector<1x7x7xf32>
    tpu.vector_store %arg2[%c0_2, %c0_3, %c0_4], %8 {strides = array<i32>} : memref<1x7x7xf32, #tpu.memory_space<vmem>>, vector<1x7x7xf32>,
    return
  }
  func.func @transform_0(%arg0: i32) -> (i32, i32, i32) {
    %c0_i32 = arith.constant 0 : i32
    %c0_i32_0 = arith.constant 0 : i32
    %c0_i32_1 = arith.constant 0 : i32
    return %arg0, %c0_i32, %c0_i32_0 : i32, i32, i32
  }
  func.func @transform_1(%arg0: i32) -> (i32, i32, i32) {
    %c0_i32 = arith.constant 0 : i32
    %c0_i32_0 = arith.constant 0 : i32
    %c0_i32_1 = arith.constant 0 : i32
    return %arg0, %c0_i32, %c0_i32_0 : i32, i32, i32
  }
}

</mosaic_0001>

<llo_original>
// kernel: tpu_custom_call.1
$region0: #{tpu_custom_call.1}
  #allocation0 [shape = 'u32[]', space=smem, size = 0x4, offset = 0x4, fixed_abs, tag = 'smem constant byte address 0x4 - core index']
  #allocation1 [shape = 'u32[144,128]{1,0:T(1,128)}', space=vmem, size = 0x12000, scoped, tag = 'internal scratch']
  %s0 = inlined_call_operand.hbm [shape: f32[2,1,7], index: 0, kind: input, shape index: {}]
  %s1 = inlined_call_operand.vmem [shape: f32[2,7,7], index: 1, kind: output, shape index: {}]
  %s2 = sld [smem:[#allocation0]]
  $region41: #{tpu_custom_call.1} parent=0
    _
  %s4 = ssub.s32 1, %s2
  %s5 = scalar_select 0, %s4, %s2
  $region1: #{tpu_custom_call.1} parent=0
    #allocation2 [shape = 'u8[1024]{0}', space=vmem, size = 0x400, scoped, tag = 'input window, operand 0']
    #allocation3 [shape = 's32[2]{0}', space=sflag, size = 0x8, scoped, tag = 'scoped memory for tpu_custom_call.1']
    %6 = vsyncpa [#allocation3], 0
    %s7 = scalar_lea.sflag [#allocation3], 1
    %8 = vsyncpa %s7, 0
    loop: start=0, step=1, limit=4
    $region2: #{tpu_custom_call.1} parent=1 // loop_pre_header
      _
    $region3: #{tpu_custom_call.1} parent=1 // loop_header
      %s10 = sphi 0, %s14
      %p11 = scmp.ge.s32.totalorder %s10, 4
      %s20 = sphi 0, %s22
      %s23 = sphi 0, %s20
      %s24 = sphi 0, %s23
      %s40 = sphi 0, %s24
      %s46 = sphi 0, %s48
      %s49 = sphi 0, %s46
      %s50 = sphi 0, %s49
      %s66 = sphi 0, %s50
    $region4: #{tpu_custom_call.1} parent=1 // loop_header_branch
      %13 = sbr.rel (%p11) target = $region8
    $region5: #{tpu_custom_call.1} parent=1 // loop_body
      %s15 = ssub.s32 %s10, 1
      %s16 = ssub.s32 %s10, 2
      %s17 = sadd.s32 %s10, 1
      %s18 = ssub.s32 %s10, %s17
      %p19 = scmp.eq.s32.totalorder %s18, 0
      %s21 = sadd.s32 %s20, 1
      %s22 = scalar_select %p19, %s20, %s21
      %p25 = pneg %p19
      %p26 = scmp.eq.s32.totalorder %s10, 1
      %p27 = por %p25, %p26
      %p28 = scmp.ne.s32.totalorder %s20, %s23
      %p29 = scmp.eq.s32.totalorder %s10, 0
      %p30 = por %p28, %p29
      %p31 = scmp.ne.s32.totalorder %s20, %s23
      %p32 = scmp.eq.s32.totalorder %s15, 1
      %p33 = por %p31, %p32
      %p34 = scmp.ne.s32.totalorder %s23, %s24
      %p35 = scmp.eq.s32.totalorder %s15, 0
      %p36 = por %p34, %p35
      %p37 = scmp.ne.s32.totalorder %s23, %s24
      %p38 = scmp.eq.s32.totalorder %s16, 1
      %p39 = por %p37, %p38
      %p41 = scmp.ne.s32.totalorder %s24, %s40
      %p42 = scmp.eq.s32.totalorder %s16, 0
      %p43 = por %p41, %p42
      %s44 = ssub.s32 %s10, %s17
      %p45 = scmp.eq.s32.totalorder %s44, 0
      %s47 = sadd.s32 %s46, 1
      %s48 = scalar_select %p45, %s46, %s47
      %p51 = pneg %p45
      %p52 = scmp.eq.s32.totalorder %s10, 1
      %p53 = por %p51, %p52
      %p54 = scmp.ne.s32.totalorder %s46, %s49
      %p55 = scmp.eq.s32.totalorder %s10, 0
      %p56 = por %p54, %p55
      %p57 = scmp.ne.s32.totalorder %s46, %s49
      %p58 = scmp.eq.s32.totalorder %s15, 1
      %p59 = por %p57, %p58
      %p60 = scmp.ne.s32.totalorder %s49, %s50
      %p61 = scmp.eq.s32.totalorder %s15, 0
      %p62 = por %p60, %p61
      %p63 = scmp.ne.s32.totalorder %s49, %s50
      %p64 = scmp.eq.s32.totalorder %s16, 1
      %p65 = por %p63, %p64
      %p67 = scmp.ne.s32.totalorder %s50, %s66
      %p68 = scmp.eq.s32.totalorder %s16, 0
      %p69 = por %p67, %p68
      %p70 = scmp.le.s32.totalorder 1, %s10
      %p71 = scmp.lt.s32.totalorder %s10, 3
      %p72 = pnand %p70, %p71
      %p73 = pneg %p72
      // Predicated region
      $region9: #{tpu_custom_call.1} parent=5 // pred_check
        _
      $region10: #{tpu_custom_call.1} parent=5 // pred_check_branch
        %75 = sbr.rel (%p72) target = $region12
      $region11: #{tpu_custom_call.1} parent=5 // pred_region
        %s76 = ssub.s32 %s10, 1
      $region12: #{tpu_custom_call.1} parent=5 // pred_fallthru
        _
      %p77 = scmp.lt.s32.totalorder %s10, 2
      // Predicated region
      $region13: #{tpu_custom_call.1} parent=5 // pred_check
        %p78 = pneg %p77
      $region14: #{tpu_custom_call.1} parent=5 // pred_check_branch
        %80 = sbr.rel (%p78) target = $region16
      $region15: #{tpu_custom_call.1} parent=5 // pred_region
        // Predicated region
        $region17: #{tpu_custom_call.1} parent=15 // pred_check
          %p81 = pneg %p30
        $region18: #{tpu_custom_call.1} parent=15 // pred_check_branch
          %83 = sbr.rel (%p81) target = $region20
        $region19: #{tpu_custom_call.1} parent=15 // pred_region
          %s84 = sand.u32 %s20, 1
          %s85 = scalar_lea.sflag [#allocation3], %s84
          %s86 = sand.u32 %s20, 1
          %s87 = scalar_lea.vmem [#allocation2], %s86
          %s89 = ssub.s32 16, 16
          %90 = vsyncadd %s85, %s89
          %s91 = smul.addr %s10, 16
          %s92 = scalar_lea.hbm %s0, %s91
          %s94 = sshll.u32 %s87, 4
          %s95 = int_to_ptr.vmem [resolvable:$true] %s94
          %97 = dma.hbm_to_vmem [thread:$0]  %s92, 16, %s95, %s85
        $region20: #{tpu_custom_call.1} parent=15 // pred_fallthru
          _
      $region16: #{tpu_custom_call.1} parent=5 // pred_fallthru
        _
      %p98 = scmp.le.s32.totalorder 1, %s10
      %p99 = scmp.lt.s32.totalorder %s10, 3
      %p100 = pnand %p98, %p99
      %p101 = pneg %p100
      // Predicated region
      $region21: #{tpu_custom_call.1} parent=5 // pred_check
        _
      $region22: #{tpu_custom_call.1} parent=5 // pred_check_branch
        %103 = sbr.rel (%p100) target = $region24
      $region23: #{tpu_custom_call.1} parent=5 // pred_region
        %s104 = ssub.s32 %s10, 1
        %s105 = sand.u32 %s23, 1
        %s106 = scalar_lea.sflag [#allocation3], %s105
        %s107 = sand.u32 %s23, 1
        %s108 = scalar_lea.vmem [#allocation2], %s107
        // Predicated region
        $region25: #{tpu_custom_call.1} parent=23 // pred_check
          %p109 = pneg %p36
        $region26: #{tpu_custom_call.1} parent=23 // pred_check_branch
          %111 = sbr.rel (%p109) target = $region28
        $region27: #{tpu_custom_call.1} parent=23 // pred_region
          %112 = dma.done %s106, 16
        $region28: #{tpu_custom_call.1} parent=23 // pred_fallthru
          _
        %s113 = sand.u32 %s23, 1
        %s114 = scalar_lea.sflag [#allocation3], %s113
        %s115 = sand.u32 %s23, 1
        %s116 = scalar_lea.vmem [#allocation2], %s115
        %p117 = pneg %p36
        %p118 = pneg %p33
        %p119 = pneg %p62
        %p120 = pneg %p59
        %p121 = scmp.lt.s32.totalorder %s15, 1
        %s122 = scalar_select %p121, %s15, 1
        %s123 = smul.addr %s122, 8
        %s124 = scalar_lea.vmem %s1, %s123
        %p125 = scmp.lt.s32.totalorder %s15, 1
        %s126 = scalar_select %p125, %s15, 1
        %s127 = smul.addr %s126, 8
        %s128 = scalar_lea.vmem %s1, %s127
        %v129 = vlaneseq
        %v130 = vshrl.u32 %v129, 7
        %v131 = vlaneseq
        %v132 = vand.u32 %v131, 127
        %vm133 = vcmp.eq.s32.totalorder %v130, %v132
        %v134 = vld [vmem:[%s108] sm:$0x1]
        %v136 = vlaneseq
        %v137 = vshrl.u32 %v136, 7
        %v138 = vsub.s32 0, %v137
        %v139 = vrot.slane %v134, %v138
        %v141 = vsel %vm133, %v139, 0.0
        %vm142 = vcmask 55296
        %143 = vst.msk [vmem:[%s128] sm:$0x7f] %vm142, %v141
        %p144 = scmp.lt.s32.totalorder %s15, 1
        %s145 = scalar_select %p144, %s15, 1
        %s146 = smul.addr %s145, 8
        %s147 = scalar_lea.vmem %s1, %s146
        // Predicated region
        $region29: #{tpu_custom_call.1} parent=23 // pred_check
          %p148 = pneg %p59
        $region30: #{tpu_custom_call.1} parent=23 // pred_check_branch
          %150 = sbr.rel (%p148) target = $region32
        $region31: #{tpu_custom_call.1} parent=23 // pred_region
          _
        $region32: #{tpu_custom_call.1} parent=23 // pred_fallthru
          _
      $region24: #{tpu_custom_call.1} parent=5 // pred_fallthru
        _
      %p151 = scmp.le.s32.totalorder 2, %s10
      // Predicated region
      $region33: #{tpu_custom_call.1} parent=5 // pred_check
        %p152 = pneg %p151
      $region34: #{tpu_custom_call.1} parent=5 // pred_check_branch
        %154 = sbr.rel (%p152) target = $region36
      $region35: #{tpu_custom_call.1} parent=5 // pred_region
        %s155 = ssub.s32 %s10, 2
        // Predicated region
        $region37: #{tpu_custom_call.1} parent=35 // pred_check
          %p156 = pneg %p65
        $region38: #{tpu_custom_call.1} parent=35 // pred_check_branch
          %158 = sbr.rel (%p156) target = $region40
        $region39: #{tpu_custom_call.1} parent=35 // pred_region
          %p159 = scmp.lt.s32.totalorder %s16, 1
          %s160 = scalar_select %p159, %s16, 1
          %s161 = smul.addr %s160, 8
          %s162 = scalar_lea.vmem %s1, %s161
        $region40: #{tpu_custom_call.1} parent=35 // pred_fallthru
          _
      $region36: #{tpu_custom_call.1} parent=5 // pred_fallthru
        _
    $region6: #{tpu_custom_call.1} parent=1 // loop_footer
      %s14 = sadd.s32 1, %s10
    $region7: #{tpu_custom_call.1} parent=1 // loop_footer_branch
      %9 = sbr.rel target = $region3
    $region8: #{tpu_custom_call.1} parent=1 // loop_exit
      _
    %163 = vsyncpa [#allocation3], 1
    %s164 = scalar_lea.sflag [#allocation3], 1
    %165 = vsyncpa %s164, 1

</llo_original>
